<compile_context>
chip_gen: v6e
topology: v6e:2x2x1
jax: 0.10.0
libtpu: 0.0.40
codegen_flags: <defaults>
</compile_context>

<pallas_src>
import functools

import jax
import jax.numpy as jnp
from jax.experimental import pallas as pl
from jax.experimental.pallas import tpu as pltpu


def _round_up(x, m):
    return ((x + m - 1) // m) * m


def _linear_kernel(x_ref, w_ref, b_ref, o_ref, acc_ref, *,
                   k_total, tk, mask_k, weight_resident):
    k = pl.program_id(1)

    @pl.when(k == 0)
    def _():
        acc_ref[...] = jnp.zeros_like(acc_ref)

    x = x_ref[...].astype(jnp.float32)                         # (tb, tk)
    if weight_resident:
        # Whole padded weight lives in VMEM; slice the current K window.
        w = w_ref[:, pl.ds(pl.multiple_of(k * tk, 128), tk)]   # (1, tk)
    else:
        w = w_ref[...]                                         # (1, tk)
    prod = x * w.astype(jnp.float32)                           # VPU elementwise

    if mask_k:
        # K-tail block contains unspecified data beyond in_features: mask it.
        col = k * tk + jax.lax.broadcasted_iota(jnp.int32, (1, tk), 1)
        prod = jnp.where(col < k_total, prod, 0.0)

    # Lane-dense accumulation: fold tk -> 128 lanes with pure vreg adds
    # (no cross-lane reduce inside the K loop).
    tb = acc_ref.shape[0]
    acc_ref[...] += prod.reshape(tb, tk // 128, 128).sum(axis=1)

    @pl.when(k == pl.num_programs(1) - 1)
    def _():
        row = jnp.sum(acc_ref[...], axis=-1) + b_ref[0]        # (tb,)  single 128->1 reduce
        o_ref[...] = row.reshape(1, 1, -1).astype(o_ref.dtype)  # lane-dense (1,1,tb) store


def linear_regression_forward(x, weight, bias, *, tb_target=1024, tk_target=4096):
    """Forward pass of LinearRegression.

    Args:
      x:      (batch, in_features) float32
      weight: (1, in_features) float32   -- PyTorch nn.Linear weight layout
      bias:   (1,) float32

    Returns:
      (batch, 1) float32
    """
    batch, in_features = x.shape
    assert weight.shape == (1, in_features)

    # ---- tile sizes --------------------------------------------------------
    batch_p8 = _round_up(batch, 8)
    tb = min(tb_target, batch_p8)
    # Ensure >= 2 programs on the parallel batch axis (dual TensorCore on v7x)
    # whenever there are enough rows to split.
    if batch_p8 <= tb and batch_p8 >= 16:
        tb = _round_up((batch_p8 + 1) // 2, 8)
    tk = min(tk_target, _round_up(in_features, 128))

    num_b = pl.cdiv(batch, tb)
    num_k = pl.cdiv(in_features, tk)
    mask_k = (in_features % tk) != 0

    # ---- only the tiny weight vector is ever padded ------------------------
    k_w = num_k * tk
    w_p = weight
    if k_w != in_features:
        w_p = jnp.zeros((1, k_w), weight.dtype).at[:, :in_features].set(weight)

    weight_resident = (k_w * 4) <= (2 << 20)   # keep whole weight in VMEM if < 2 MiB
    if weight_resident:
        w_spec = pl.BlockSpec((1, k_w), lambda i, k: (0, 0))
    else:
        w_spec = pl.BlockSpec((1, tk), lambda i, k: (0, k))

    b = bias.reshape(1)   # scalar, lives in SMEM

    kernel = functools.partial(
        _linear_kernel,
        k_total=in_features, tk=tk, mask_k=mask_k, weight_resident=weight_resident)

    out = pl.pallas_call(
        kernel,
        out_shape=jax.ShapeDtypeStruct((num_b, 1, tb), x.dtype),
        grid_spec=pltpu.PrefetchScalarGridSpec(
            num_scalar_prefetch=0,
            grid=(num_b, num_k),
            in_specs=[
                pl.BlockSpec((tb, tk), lambda i, k: (i, k)),         # x tile (no padded copy)
                w_spec,                                              # weight (resident or tiled)
                pl.BlockSpec(memory_space=pltpu.MemorySpace.SMEM),   # bias scalar
            ],
            out_specs=pl.BlockSpec((1, 1, tb), lambda i, k: (i, 0, 0)),
            scratch_shapes=[pltpu.VMEM((tb, 128), jnp.float32)],
        ),
        compiler_params=pltpu.CompilerParams(
            dimension_semantics=("parallel", "arbitrary"),
            vmem_limit_bytes=48 << 20),
    )(x, w_p, b)

    # (num_b, 1, tb) -> (num_b*tb, 1), drop ragged batch tail.
    return out.reshape(num_b * tb, 1)[:batch]


if __name__ == "__main__":
    batch = 8
    in_features = 32

    key = jax.random.PRNGKey(0)
    kx, kw, kb = jax.random.split(key, 3)

    # Deterministic parameter init mimicking nn.Linear's uniform(-1/sqrt(in), 1/sqrt(in)).
    bound = 1.0 / jnp.sqrt(jnp.float32(in_features))
    weight = jax.random.uniform(kw, (1, in_features), jnp.float32, -bound, bound)
    bias = jax.random.uniform(kb, (1,), jnp.float32, -bound, bound)

    x = jax.random.normal(kx, (batch, in_features), jnp.float32)

    y = linear_regression_forward(x, weight, bias)
    jax.block_until_ready(y)

    # Pure-JAX reference check.
    y_ref = x @ weight.T + bias
    assert y.shape == (batch, 1)
    assert jnp.allclose(y, y_ref, atol=1e-5, rtol=1e-5)

    print("KERNEL_OK")
</pallas_src>

<mosaic_0001>
module attributes {stable_mosaic.version = 11 : i64} {
  func.func @_linear_kernel(%arg0: i32, %arg1: i32, %arg2: memref<8x128xf32, #tpu.memory_space<vmem>>, %arg3: memref<1x128xf32, #tpu.memory_space<vmem>>, %arg4: memref<1xf32, #tpu.memory_space<smem>>, %arg5: memref<1x1x8xf32, #tpu.memory_space<vmem>>, %arg6: memref<8x128xf32, #tpu.memory_space<vmem>>) attributes {dimension_semantics = [#tpu.dimension_semantics<parallel>, #tpu.dimension_semantics<arbitrary>], iteration_bounds = array<i64: 1, 1>, scalar_prefetch = 0 : i64, scratch_operands = 1 : i64, tpu.core_type = #tpu.core_type<tc>, window_params = [{transform_indices = @transform_0, window_bounds = array<i64: 8, 128>}, {pipeline_mode = #tpu.pipeline_mode<synchronous>, transform_indices = @transform_1, window_bounds = array<i64: 1, 128>}, {transform_indices = @transform_2, window_bounds = array<i64: 1>}, {transform_indices = @transform_3, window_bounds = array<i64: 1, 1, 8>}]} {
    %c0_i32 = arith.constant 0 : i32
    %0 = arith.cmpi eq, %arg1, %c0_i32 : i32
    %1 = arith.extui %0 : i1 to i32
    %c0_i32_0 = arith.constant 0 : i32
    %2 = arith.cmpi ne, %1, %c0_i32_0 : i32
    scf.if %2 {
      %cst_11 = arith.constant 0.000000e+00 : f32
      %28 = vector.broadcast %cst_11 : f32 to vector<8x128xf32>
      %c0_12 = arith.constant 0 : index
      %c0_13 = arith.constant 0 : index
      %29 = vector.load %arg6[%c0_12, %c0_13] : memref<8x128xf32, #tpu.memory_space<vmem>>, vector<8x128xf32>
      tpu.vector_store %arg6[%c0_12, %c0_13], %28 {strides = array<i32>} : memref<8x128xf32, #tpu.memory_space<vmem>>, vector<8x128xf32>,
    } else {
    }
    %c0 = arith.constant 0 : index
    %c0_1 = arith.constant 0 : index
    %3 = vector.load %arg2[%c0, %c0_1] : memref<8x128xf32, #tpu.memory_space<vmem>>, vector<8x128xf32>
    %c128_i32 = arith.constant 128 : i32
    %4 = arith.muli %arg1, %c128_i32 : i32
    %5 = tpu.assume_multiple %4, 128 : i32
    %c0_2 = arith.constant 0 : index
    %6 = arith.index_cast %5 : i32 to index
    %7 = vector.load %arg3[%c0_2, %6] : memref<1x128xf32, #tpu.memory_space<vmem>>, vector<1x128xf32>
    %8 = vector.broadcast %7 : vector<1x128xf32> to vector<8x128xf32>
    %9 = arith.mulf %3, %8 : vector<8x128xf32>
    %c128_i32_3 = arith.constant 128 : i32
    %10 = arith.muli %arg1, %c128_i32_3 : i32
    %11 = tpu.iota {dimensions = array<i32: 1>} : vector<1x128xi32>
    %12 = vector.broadcast %10 : i32 to vector<1x128xi32>
    %13 = arith.addi %12, %11 : vector<1x128xi32>
    %c32_i32 = arith.constant 32 : i32
    %14 = vector.broadcast %c32_i32 : i32 to vector<1x128xi32>
    %15 = arith.cmpi slt, %13, %14 : vector<1x128xi32>
    %cst = arith.constant 0.000000e+00 : f32
    %16 = vector.shape_cast %15 : vector<1x128xi1> to vector<1x128xi1>
    %17 = vector.broadcast %16 : vector<1x128xi1> to vector<8x128xi1>
    %18 = vector.broadcast %cst : f32 to vector<8x128xf32>
    %19 = arith.select %17, %9, %18 : vector<8x128xi1>, vector<8x128xf32>
    %c0_4 = arith.constant 0 : index
    %c0_5 = arith.constant 0 : index
    %20 = vector.load %arg6[%c0_4, %c0_5] : memref<8x128xf32, #tpu.memory_space<vmem>>, vector<8x128xf32>
    %21 = vector.shape_cast %19 : vector<8x128xf32> to vector<8x1x128xf32>
    %cst_6 = arith.constant dense<0.000000e+00> : vector<8x128xf32>
    %22 = vector.multi_reduction <add>, %21, %cst_6 [1] : vector<8x1x128xf32> to vector<8x128xf32>
    %23 = arith.addf %20, %22 : vector<8x128xf32>
    %c0_7 = arith.constant 0 : index
    %c0_8 = arith.constant 0 : index
    %24 = vector.load %arg6[%c0_7, %c0_8] : memref<8x128xf32, #tpu.memory_space<vmem>>, vector<8x128xf32>
    tpu.vector_store %arg6[%c0_7, %c0_8], %23 {strides = array<i32>} : memref<8x128xf32, #tpu.memory_space<vmem>>, vector<8x128xf32>,
    %c0_i32_9 = arith.constant 0 : i32
    %25 = arith.cmpi eq, %arg1, %c0_i32_9 : i32
    %26 = arith.extui %25 : i1 to i32
    %c0_i32_10 = arith.constant 0 : i32
    %27 = arith.cmpi ne, %26, %c0_i32_10 : i32
    scf.if %27 {
      %c0_11 = arith.constant 0 : index
      %c0_12 = arith.constant 0 : index
      %28 = vector.load %arg6[%c0_11, %c0_12] : memref<8x128xf32, #tpu.memory_space<vmem>>, vector<8x128xf32>
      %cst_13 = arith.constant dense<0.000000e+00> : vector<8xf32>
      %29 = vector.multi_reduction <add>, %28, %cst_13 [1] : vector<8x128xf32> to vector<8xf32>
      %c0_14 = arith.constant 0 : index
      %30 = memref.load %arg4[%c0_14] : memref<1xf32, #tpu.memory_space<smem>>
      %31 = vector.broadcast %30 : f32 to vector<8xf32>
      %32 = arith.addf %29, %31 : vector<8xf32>
      %33 = vector.shape_cast %32 : vector<8xf32> to vector<1x1x8xf32>
      %c0_15 = arith.constant 0 : index
      %c0_16 = arith.constant 0 : index
      %c0_17 = arith.constant 0 : index
      %34 = vector.load %arg5[%c0_15, %c0_16, %c0_17] : memref<1x1x8xf32, #tpu.memory_space<vmem>>, vector<1x1x8xf32>
      tpu.vector_store %arg5[%c0_15, %c0_16, %c0_17], %33 {strides = array<i32>} : memref<1x1x8xf32, #tpu.memory_space<vmem>>, vector<1x1x8xf32>,
    } else {
    }
    return
  }
  func.func @transform_0(%arg0: i32, %arg1: i32) -> (i32, i32) {
    %c0_i32 = arith.constant 0 : i32
    return %arg0, %arg1 : i32, i32
  }
  func.func @transform_1(%arg0: i32, %arg1: i32) -> (i32, i32) {
    %c0_i32 = arith.constant 0 : i32
    %c0_i32_0 = arith.constant 0 : i32
    %c0_i32_1 = arith.constant 0 : i32
    return %c0_i32, %c0_i32_0 : i32, i32
  }
  func.func @transform_2(%arg0: i32, %arg1: i32) -> i32 {
    %c0_i32 = arith.constant 0 : i32
    %c0_i32_0 = arith.constant 0 : i32
    return %c0_i32 : i32
  }
  func.func @transform_3(%arg0: i32, %arg1: i32) -> (i32, i32, i32) {
    %c0_i32 = arith.constant 0 : i32
    %c0_i32_0 = arith.constant 0 : i32
    %c0_i32_1 = arith.constant 0 : i32
    return %arg0, %c0_i32, %c0_i32_0 : i32, i32, i32
  }
}

</mosaic_0001>

<llo_original>
// kernel: tpu_custom_call.1
$region0: #{tpu_custom_call.1}
  #allocation0 [shape = 'u32[]', space=smem, size = 0x4, offset = 0x4, fixed_abs, tag = 'smem constant byte address 0x4 - core index']
  #allocation1 [shape = 'u32[144,128]{1,0:T(1,128)}', space=vmem, size = 0x12000, scoped, tag = 'internal scratch']
  #allocation2 [shape = 'f32[8,128]{1,0:T(8,128)}', space=vmem, size = 0x1000, scoped, tag = 'scratch operand']
  #allocation3 [shape = 'f32[1]{0:T(128)S(6)}', space=smem, size = 0x200, scoped, tag = 'scoped memory for tpu_custom_call.1']
  %s0 = inlined_call_operand.hbm [shape: f32[8,32], index: 0, kind: input, shape index: {}]
  %s1 = inlined_call_operand.vmem [shape: f32[1,128], index: 1, kind: input, shape index: {}]
  %s2 = inlined_call_operand.<no memory space> [shape: f32[1], index: 2, kind: input, shape index: {}]
  %s3 = inlined_call_operand.hbm [shape: f32[1,1,8], index: 3, kind: output, shape index: {}]
  %s4 = sld [smem:[#allocation0]]
  $region34: #{tpu_custom_call.1} parent=0
    _
  %s6 = ssub.s32 1, %s4
  %s7 = scalar_select 0, %s6, %s4
  %8 = sst [smem:[#allocation3]] %s2
  $region1: #{tpu_custom_call.1} parent=0
    #allocation4 [shape = 'u8[4096]{0}', space=vmem, size = 0x1000, scoped, tag = 'input window, operand 0, single buffered']
    #allocation5 [shape = 's32[1]{0}', space=sflag, size = 0x4, scoped, tag = 'scoped memory for tpu_custom_call.1']
    #allocation6 [shape = 's32[1]{0}', space=sflag, size = 0x4, scoped, tag = 'scoped memory for tpu_custom_call.1']
    #allocation7 [shape = 'u8[512]{0}', space=vmem, size = 0x400, scoped, tag = 'output window, operand 0, single buffered']
    %9 = vsyncpa [#allocation5], 0
    %10 = vsyncpa [#allocation6], 0
    // Predicated region
    $region2: #{tpu_custom_call.1} parent=1 // pred_check
      _
    $region3: #{tpu_custom_call.1} parent=1 // pred_check_branch
      %12 = sbr.rel (0) target = $region5
    $region4: #{tpu_custom_call.1} parent=1 // pred_region
      %s14 = ssub.s32 128, 128
      %15 = vsyncadd [#allocation5], %s14
      %s17 = sshll.u32 [#allocation4], 4
      %s18 = int_to_ptr.vmem [resolvable:$true] %s17
      %20 = dma.hbm_to_vmem [thread:$0]  %s0, 128, %s18, [#allocation5]
    $region5: #{tpu_custom_call.1} parent=1 // pred_fallthru
      _
    // Predicated region
    $region6: #{tpu_custom_call.1} parent=1 // pred_check
      _
    $region7: #{tpu_custom_call.1} parent=1 // pred_check_branch
      %22 = sbr.rel (0) target = $region9
    $region8: #{tpu_custom_call.1} parent=1 // pred_region
      _
    $region9: #{tpu_custom_call.1} parent=1 // pred_fallthru
      _
    // Predicated region
    $region10: #{tpu_custom_call.1} parent=1 // pred_check
      _
    $region11: #{tpu_custom_call.1} parent=1 // pred_check_branch
      %24 = sbr.rel (0) target = $region13
    $region12: #{tpu_custom_call.1} parent=1 // pred_region
      _
    $region13: #{tpu_custom_call.1} parent=1 // pred_fallthru
      _
    // Predicated region
    $region14: #{tpu_custom_call.1} parent=1 // pred_check
      _
    $region15: #{tpu_custom_call.1} parent=1 // pred_check_branch
      %26 = sbr.rel (0) target = $region17
    $region16: #{tpu_custom_call.1} parent=1 // pred_region
      %27 = dma.done [#allocation5], 128
    $region17: #{tpu_custom_call.1} parent=1 // pred_fallthru
      _
    %p28 = scmp.eq.s32.totalorder 0, 0
    // Predicated region
    $region18: #{tpu_custom_call.1} parent=1 // pred_check
      %p29 = pneg %p28
    $region19: #{tpu_custom_call.1} parent=1 // pred_check_branch
      %31 = sbr.rel (%p29) target = $region21
    $region20: #{tpu_custom_call.1} parent=1 // pred_region
      %32 = vst [vmem:[#allocation2] sm:$0xff] 0.0
    $region21: #{tpu_custom_call.1} parent=1 // pred_fallthru
      _
    %v33 = vld [vmem:[#allocation4] sm:$0xff]
    %s34 = smul.u32 0, 128
    %s35 = sshra.s32 %s34, 7
    %s36 = sand.u32 %s34, 127
    %s37 = scalar_lea.vmem %s1, %s35
    %v38 = vld [vmem:[%s37] sm:$0x1]
    %v40 = vlaneseq
    %v41 = vshrl.u32 %v40, 7
    %v42 = vsub.s32 0, %v41
    %v43 = vrot.slane %v38, %v42
    %v45 = vmul.f32 %v33, %v43
    %v46 = vlaneseq
    %v47 = vand.u32 %v46, 127
    %v48 = vstv %s34
    %v49 = vadd.s32 %v48, %v47
    %vm50 = vcmp.lt.s32.totalorder %v49, 32
    %v51 = vsel %vm50, 1, 0
    %vm52 = vcmp.eq.s32.totalorder %v51, 1
    %v53 = vsel %vm52, %v45, 0.0
    %v54 = vld [vmem:[#allocation2] sm:$0xff]
    %v55 = vadd.f32 %v53, 0.0
    %v56 = vadd.f32 %v54, %v55
    %57 = vst [vmem:[#allocation2] sm:$0xff] %v56
    // Predicated region
    $region22: #{tpu_custom_call.1} parent=1 // pred_check
      %p58 = pneg %p28
    $region23: #{tpu_custom_call.1} parent=1 // pred_check_branch
      %60 = sbr.rel (%p58) target = $region25
    $region24: #{tpu_custom_call.1} parent=1 // pred_region
      %v61 = vld [vmem:[#allocation2] sm:$0xff]
      %62 = vadd.xlane.f32.xlu0 %v61
      %v63 = vpop.xlane.xlu0 %62
      %s64 = sld [smem:[#allocation3]]
      %v65 = vstv %s64
      %v66 = vadd.f32 %v63, %v65
      %v68 = vlaneseq
      %v69 = vshrl.u32 %v68, 7
      %v70 = vsub.s32 %v47, %v69
      %v71 = vrot.slane %v66, %v70
      %vm73 = vcmask 57344
      %74 = vst.msk [vmem:[#allocation7] sm:$0x1] %vm73, %v71
    $region25: #{tpu_custom_call.1} parent=1 // pred_fallthru
      _
    // Predicated region
    $region26: #{tpu_custom_call.1} parent=1 // pred_check
      _
    $region27: #{tpu_custom_call.1} parent=1 // pred_check_branch
      %76 = sbr.rel (0) target = $region29
    $region28: #{tpu_custom_call.1} parent=1 // pred_region
      %s78 = ssub.s32 16, 16
      %79 = vsyncadd [#allocation6], %s78
      %s81 = sshll.u32 [#allocation7], 4
      %s82 = int_to_ptr.vmem [resolvable:$true] %s81
      %84 = dma.vmem_to_hbm [thread:$0]  %s82, 16, %s3, [#allocation6]
    $region29: #{tpu_custom_call.1} parent=1 // pred_fallthru
      _
    // Predicated region
    $region30: #{tpu_custom_call.1} parent=1 // pred_check
      _
    $region31: #{tpu_custom_call.1} parent=1 // pred_check_branch
      %86 = sbr.rel (0) target = $region33
    $region32: #{tpu_custom_call.1} parent=1 // pred_region
      %87 = dma.done [#allocation6], 16
    $region33: #{tpu_custom_call.1} parent=1 // pred_fallthru
      _
    %88 = vsyncpa [#allocation5], 1
    %89 = vsyncpa [#allocation6], 1

</llo_original>
